<compile_context>
chip_gen: v5e
topology: v5e:2x2
jax: 0.10.0
libtpu: 0.0.40
codegen_flags: <defaults>
</compile_context>

<pallas_src>
import jax
import jax.numpy as jnp
from jax.experimental import pallas as pl
from jax.experimental.pallas import tpu as pltpu


def _rgcn_post_kernel(emb_ref, h_ref, b_ref, repr_ref):
    # Elementwise hot path on a whole (TM, D) row slab: bias add + ReLU,
    # then a single lane-dense (TM, 2*D) store of [embed_rows | relu(h+bias)].
    hv = jnp.maximum(h_ref[...] + b_ref[...], 0.0)
    repr_ref[...] = jnp.concatenate([emb_ref[...], hv], axis=-1)


def rgcn_layer_forward(h, idx, embed, bias, *, tm=512):
    """h: (N, D) post-propagate node features, idx: (N,) int32 node ids,
    embed: (num_nodes, D) TransE embedding table, bias: (D,).
    Returns (h_out (N, D), repr (N, 2, D))."""
    N, D = h.shape

    # Bulk gather of the embedding rows outside the kernel (XLA gather is fine
    # here and lets the kernel stream large contiguous tiles).
    emb_rows = jnp.take(embed, idx, axis=0)
    bias2d = bias.reshape(1, D)

    # Row-tile size: multiple of 8 sublanes (or the full N when N is small).
    TM = min(tm, N)
    if TM != N:
        TM = max(8, (TM // 8) * 8)
    grid = (pl.cdiv(N, TM),)

    repr2d = pl.pallas_call(
        _rgcn_post_kernel,
        grid=grid,
        in_specs=[
            pl.BlockSpec((TM, D), lambda i: (i, 0)),   # gathered embed rows
            pl.BlockSpec((TM, D), lambda i: (i, 0)),   # h rows
            pl.BlockSpec((1, D), lambda i: (0, 0)),    # bias (broadcast)
        ],
        out_specs=pl.BlockSpec((TM, 2 * D), lambda i: (i, 0)),
        out_shape=jax.ShapeDtypeStruct((N, 2 * D), h.dtype),
        compiler_params=pltpu.CompilerParams(
            dimension_semantics=("parallel",)),
    )(emb_rows, h, bias2d)

    node_repr = repr2d.reshape(N, 2, D)
    h_out = repr2d[:, D:]      # relu(h + bias); no duplicate in-kernel store
    return h_out, node_repr


def _xavier_uniform(key, shape, gain):
    fan_out, fan_in = shape[0], shape[1]
    bound = gain * (6.0 / (fan_in + fan_out)) ** 0.5
    return jax.random.uniform(key, shape, jnp.float32, -bound, bound)


if __name__ == "__main__":
    # Small synthetic shapes consistent with the module; out_dim=64 so the
    # repr slab is 2*D = 128 lanes (lane-dense stores).
    N = 512            # nodes in the (sub)graph
    out_dim = 64       # out_dim
    num_nodes = 1000   # embedding table rows (kept small for the demo)
    relu_gain = 2.0 ** 0.5

    key = jax.random.PRNGKey(0)
    k_h, k_emb, k_bias, k_idx = jax.random.split(key, 4)

    h = jax.random.normal(k_h, (N, out_dim), jnp.float32)            # g.ndata['h']
    embed = _xavier_uniform(k_emb, (num_nodes, out_dim), relu_gain)  # self.embed
    bias = jax.random.uniform(k_bias, (out_dim,), jnp.float32, -0.1, 0.1)  # self.bias
    idx = jax.random.randint(k_idx, (N,), 0, num_nodes, jnp.int32)   # g.ndata['idx']

    h_out, node_repr = rgcn_layer_forward(h, idx, embed, bias, tm=256)
    jax.block_until_ready((h_out, node_repr))

    # Plain-JAX reference for a sanity check.
    h_ref = jnp.maximum(h + bias[None, :], 0.0)
    repr_ref = jnp.concatenate(
        [embed[idx], h_ref], axis=1).reshape(-1, 2, out_dim)

    assert h_out.shape == (N, out_dim) and node_repr.shape == (N, 2, out_dim)
    assert jnp.allclose(h_out, h_ref, atol=1e-6)
    assert jnp.allclose(node_repr, repr_ref, atol=1e-6)
    print("KERNEL_OK")
</pallas_src>

<mosaic_0001>
module attributes {stable_mosaic.version = 11 : i64} {
  func.func @_rgcn_post_kernel(%arg0: i32, %arg1: memref<256x64xf32, #tpu.memory_space<vmem>>, %arg2: memref<256x64xf32, #tpu.memory_space<vmem>>, %arg3: memref<1x64xf32, #tpu.memory_space<vmem>>, %arg4: memref<256x128xf32, #tpu.memory_space<vmem>>) attributes {dimension_semantics = [#tpu.dimension_semantics<parallel>], iteration_bounds = array<i64: 2>, scalar_prefetch = 0 : i64, scratch_operands = 0 : i64, tpu.core_type = #tpu.core_type<tc>, window_params = [{transform_indices = @transform_0, window_bounds = array<i64: 256, 64>}, {transform_indices = @transform_1, window_bounds = array<i64: 256, 64>}, {pipeline_mode = #tpu.pipeline_mode<synchronous>, transform_indices = @transform_2, window_bounds = array<i64: 1, 64>}, {transform_indices = @transform_3, window_bounds = array<i64: 256, 128>}]} {
    %c0 = arith.constant 0 : index
    %c0_0 = arith.constant 0 : index
    %0 = vector.load %arg2[%c0, %c0_0] : memref<256x64xf32, #tpu.memory_space<vmem>>, vector<256x64xf32>
    %c0_1 = arith.constant 0 : index
    %c0_2 = arith.constant 0 : index
    %1 = vector.load %arg3[%c0_1, %c0_2] : memref<1x64xf32, #tpu.memory_space<vmem>>, vector<1x64xf32>
    %2 = vector.broadcast %1 : vector<1x64xf32> to vector<256x64xf32>
    %3 = arith.addf %0, %2 : vector<256x64xf32>
    %cst = arith.constant 0.000000e+00 : f32
    %4 = vector.broadcast %cst : f32 to vector<256x64xf32>
    %5 = arith.maximumf %3, %4 : vector<256x64xf32>
    %c0_3 = arith.constant 0 : index
    %c0_4 = arith.constant 0 : index
    %6 = vector.load %arg1[%c0_3, %c0_4] : memref<256x64xf32, #tpu.memory_space<vmem>>, vector<256x64xf32>
    %7 = tpu.concatenate %6, %5 in 1 : vector<256x64xf32>, vector<256x64xf32> -> vector<256x128xf32>
    %c0_5 = arith.constant 0 : index
    %c0_6 = arith.constant 0 : index
    %8 = vector.load %arg4[%c0_5, %c0_6] : memref<256x128xf32, #tpu.memory_space<vmem>>, vector<256x128xf32>
    tpu.vector_store %arg4[%c0_5, %c0_6], %7 {strides = array<i32>} : memref<256x128xf32, #tpu.memory_space<vmem>>, vector<256x128xf32>,
    return
  }
  func.func @transform_0(%arg0: i32) -> (i32, i32) {
    %c0_i32 = arith.constant 0 : i32
    %c0_i32_0 = arith.constant 0 : i32
    return %arg0, %c0_i32 : i32, i32
  }
  func.func @transform_1(%arg0: i32) -> (i32, i32) {
    %c0_i32 = arith.constant 0 : i32
    %c0_i32_0 = arith.constant 0 : i32
    return %arg0, %c0_i32 : i32, i32
  }
  func.func @transform_2(%arg0: i32) -> (i32, i32) {
    %c0_i32 = arith.constant 0 : i32
    %c0_i32_0 = arith.constant 0 : i32
    %c0_i32_1 = arith.constant 0 : i32
    return %c0_i32, %c0_i32_0 : i32, i32
  }
  func.func @transform_3(%arg0: i32) -> (i32, i32) {
    %c0_i32 = arith.constant 0 : i32
    %c0_i32_0 = arith.constant 0 : i32
    return %arg0, %c0_i32 : i32, i32
  }
}

</mosaic_0001>

<llo_original>
// kernel: tpu_custom_call.1
$region0: #{tpu_custom_call.1}
  #allocation0 [shape = 'u32[]', space=smem, size = 0x4, offset = 0x4, fixed_abs, tag = 'smem constant byte address 0x4 - core index']
  #allocation1 [shape = 'u32[72,128]{1,0:T(1,128)}', space=vmem, size = 0x9000, scoped, tag = 'internal scratch']
  %s0 = inlined_call_operand.vmem [shape: f32[512,64], index: 0, kind: input, shape index: {}]
  %s1 = inlined_call_operand.vmem [shape: f32[512,64], index: 1, kind: input, shape index: {}]
  %s2 = inlined_call_operand.vmem [shape: f32[1,64], index: 2, kind: input, shape index: {}]
  %s3 = inlined_call_operand.hbm [shape: f32[512,128], index: 3, kind: output, shape index: {}]
  %s4 = sld [smem:[#allocation0]]
  $region45: #{tpu_custom_call.1} parent=0
    _
  %s6 = ssub.s32 1, %s4
  %s7 = scalar_select 0, %s6, %s4
  $region1: #{tpu_custom_call.1} parent=0
    #allocation2 [shape = 'u8[262144]{0}', space=vmem, size = 0x40000, scoped, tag = 'output window, operand 0']
    #allocation3 [shape = 's32[2]{0}', space=sflag, size = 0x8, scoped, tag = 'scoped memory for tpu_custom_call.1']
    %8 = vsyncpa [#allocation3], 0
    %s9 = scalar_lea.sflag [#allocation3], 1
    %10 = vsyncpa %s9, 0
    loop: start=0, step=1, limit=4
    $region2: #{tpu_custom_call.1} parent=1 // loop_pre_header
      _
    $region3: #{tpu_custom_call.1} parent=1 // loop_header
      %s12 = sphi 0, %s16
      %p13 = scmp.ge.s32.totalorder %s12, 4
      %s22 = sphi 0, %s24
      %s25 = sphi 0, %s22
      %s26 = sphi 0, %s25
      %s42 = sphi 0, %s26
      %s48 = sphi 0, %s50
      %s51 = sphi 0, %s48
      %s52 = sphi 0, %s51
      %s68 = sphi 0, %s52
      %s72 = sphi 0, %s72
      %s74 = sphi 0, %s72
      %s75 = sphi 0, %s74
      %s89 = sphi 0, %s75
      %s95 = sphi 0, %s97
      %s98 = sphi 0, %s95
      %s99 = sphi 0, %s98
      %s115 = sphi 0, %s99
    $region4: #{tpu_custom_call.1} parent=1 // loop_header_branch
      %15 = sbr.rel (%p13) target = $region8
    $region5: #{tpu_custom_call.1} parent=1 // loop_body
      %s17 = ssub.s32 %s12, 1
      %s18 = ssub.s32 %s12, 2
      %s19 = sadd.s32 %s12, 1
      %s20 = ssub.s32 %s12, %s19
      %p21 = scmp.eq.s32.totalorder %s20, 0
      %s23 = sadd.s32 %s22, 1
      %s24 = scalar_select %p21, %s22, %s23
      %p27 = pneg %p21
      %p28 = scmp.eq.s32.totalorder %s12, 1
      %p29 = por %p27, %p28
      %p30 = scmp.ne.s32.totalorder %s22, %s25
      %p31 = scmp.eq.s32.totalorder %s12, 0
      %p32 = por %p30, %p31
      %p33 = scmp.ne.s32.totalorder %s22, %s25
      %p34 = scmp.eq.s32.totalorder %s17, 1
      %p35 = por %p33, %p34
      %p36 = scmp.ne.s32.totalorder %s25, %s26
      %p37 = scmp.eq.s32.totalorder %s17, 0
      %p38 = por %p36, %p37
      %p39 = scmp.ne.s32.totalorder %s25, %s26
      %p40 = scmp.eq.s32.totalorder %s18, 1
      %p41 = por %p39, %p40
      %p43 = scmp.ne.s32.totalorder %s26, %s42
      %p44 = scmp.eq.s32.totalorder %s18, 0
      %p45 = por %p43, %p44
      %s46 = ssub.s32 %s12, %s19
      %p47 = scmp.eq.s32.totalorder %s46, 0
      %s49 = sadd.s32 %s48, 1
      %s50 = scalar_select %p47, %s48, %s49
      %p53 = pneg %p47
      %p54 = scmp.eq.s32.totalorder %s12, 1
      %p55 = por %p53, %p54
      %p56 = scmp.ne.s32.totalorder %s48, %s51
      %p57 = scmp.eq.s32.totalorder %s12, 0
      %p58 = por %p56, %p57
      %p59 = scmp.ne.s32.totalorder %s48, %s51
      %p60 = scmp.eq.s32.totalorder %s17, 1
      %p61 = por %p59, %p60
      %p62 = scmp.ne.s32.totalorder %s51, %s52
      %p63 = scmp.eq.s32.totalorder %s17, 0
      %p64 = por %p62, %p63
      %p65 = scmp.ne.s32.totalorder %s51, %s52
      %p66 = scmp.eq.s32.totalorder %s18, 1
      %p67 = por %p65, %p66
      %p69 = scmp.ne.s32.totalorder %s52, %s68
      %p70 = scmp.eq.s32.totalorder %s18, 0
      %p71 = por %p69, %p70
      %s73 = sadd.s32 %s72, 1
      %p76 = scmp.eq.s32.totalorder %s12, 1
      %p77 = scmp.ne.s32.totalorder %s72, %s74
      %p78 = scmp.eq.s32.totalorder %s12, 0
      %p79 = por %p77, %p78
      %p80 = scmp.ne.s32.totalorder %s72, %s74
      %p81 = scmp.eq.s32.totalorder %s17, 1
      %p82 = por %p80, %p81
      %p83 = scmp.ne.s32.totalorder %s74, %s75
      %p84 = scmp.eq.s32.totalorder %s17, 0
      %p85 = por %p83, %p84
      %p86 = scmp.ne.s32.totalorder %s74, %s75
      %p87 = scmp.eq.s32.totalorder %s18, 1
      %p88 = por %p86, %p87
      %p90 = scmp.ne.s32.totalorder %s75, %s89
      %p91 = scmp.eq.s32.totalorder %s18, 0
      %p92 = por %p90, %p91
      %s93 = ssub.s32 %s12, %s19
      %p94 = scmp.eq.s32.totalorder %s93, 0
      %s96 = sadd.s32 %s95, 1
      %s97 = scalar_select %p94, %s95, %s96
      %p100 = pneg %p94
      %p101 = scmp.eq.s32.totalorder %s12, 1
      %p102 = por %p100, %p101
      %p103 = scmp.ne.s32.totalorder %s95, %s98
      %p104 = scmp.eq.s32.totalorder %s12, 0
      %p105 = por %p103, %p104
      %p106 = scmp.ne.s32.totalorder %s95, %s98
      %p107 = scmp.eq.s32.totalorder %s17, 1
      %p108 = por %p106, %p107
      %p109 = scmp.ne.s32.totalorder %s98, %s99
      %p110 = scmp.eq.s32.totalorder %s17, 0
      %p111 = por %p109, %p110
      %p112 = scmp.ne.s32.totalorder %s98, %s99
      %p113 = scmp.eq.s32.totalorder %s18, 1
      %p114 = por %p112, %p113
      %p116 = scmp.ne.s32.totalorder %s99, %s115
      %p117 = scmp.eq.s32.totalorder %s18, 0
      %p118 = por %p116, %p117
      %p119 = scmp.le.s32.totalorder 1, %s12
      %p120 = scmp.lt.s32.totalorder %s12, 3
      %p121 = pnand %p119, %p120
      %p122 = pneg %p121
      // Predicated region
      $region9: #{tpu_custom_call.1} parent=5 // pred_check
        _
      $region10: #{tpu_custom_call.1} parent=5 // pred_check_branch
        %124 = sbr.rel (%p121) target = $region12
      $region11: #{tpu_custom_call.1} parent=5 // pred_region
        %s125 = ssub.s32 %s12, 1
        // Predicated region
        $region13: #{tpu_custom_call.1} parent=11 // pred_check
          %p126 = pneg %p85
        $region14: #{tpu_custom_call.1} parent=11 // pred_check_branch
          %128 = sbr.rel (%p126) target = $region16
        $region15: #{tpu_custom_call.1} parent=11 // pred_region
          _
        $region16: #{tpu_custom_call.1} parent=11 // pred_fallthru
          _
      $region12: #{tpu_custom_call.1} parent=5 // pred_fallthru
        _
      %p129 = scmp.lt.s32.totalorder %s12, 2
      // Predicated region
      $region17: #{tpu_custom_call.1} parent=5 // pred_check
        %p130 = pneg %p129
      $region18: #{tpu_custom_call.1} parent=5 // pred_check_branch
        %132 = sbr.rel (%p130) target = $region20
      $region19: #{tpu_custom_call.1} parent=5 // pred_region
        // Predicated region
        $region21: #{tpu_custom_call.1} parent=19 // pred_check
          %p133 = pneg %p32
        $region22: #{tpu_custom_call.1} parent=19 // pred_check_branch
          %135 = sbr.rel (%p133) target = $region24
        $region23: #{tpu_custom_call.1} parent=19 // pred_region
          %s136 = smul.u32 32, %s12
          %p137 = scmp.lt.s32.totalorder %s136, 63
          %s138 = scalar_select %p137, %s136, 63
          %s139 = smul.addr %s138, 8
          %s140 = scalar_lea.vmem %s0, %s139
          %s141 = smul.u32 32, %s12
        $region24: #{tpu_custom_call.1} parent=19 // pred_fallthru
          _
        // Predicated region
        $region25: #{tpu_custom_call.1} parent=19 // pred_check
          %p142 = pneg %p58
        $region26: #{tpu_custom_call.1} parent=19 // pred_check_branch
          %144 = sbr.rel (%p142) target = $region28
        $region27: #{tpu_custom_call.1} parent=19 // pred_region
          %s145 = smul.u32 32, %s12
          %p146 = scmp.lt.s32.totalorder %s145, 63
          %s147 = scalar_select %p146, %s145, 63
          %s148 = smul.addr %s147, 8
          %s149 = scalar_lea.vmem %s1, %s148
          %s150 = smul.u32 32, %s12
        $region28: #{tpu_custom_call.1} parent=19 // pred_fallthru
          _
      $region20: #{tpu_custom_call.1} parent=5 // pred_fallthru
        _
      %p151 = scmp.le.s32.totalorder 1, %s12
      %p152 = scmp.lt.s32.totalorder %s12, 3
      %p153 = pnand %p151, %p152
      %p154 = pneg %p153
      // Predicated region
      $region29: #{tpu_custom_call.1} parent=5 // pred_check
        _
      $region30: #{tpu_custom_call.1} parent=5 // pred_check_branch
        %156 = sbr.rel (%p153) target = $region32
      $region31: #{tpu_custom_call.1} parent=5 // pred_region
        %s157 = ssub.s32 %s12, 1
        %s158 = smul.u32 32, %s17
        %p159 = scmp.lt.s32.totalorder %s158, 63
        %s160 = scalar_select %p159, %s158, 63
        %s161 = smul.addr %s160, 8
        %s162 = scalar_lea.vmem %s0, %s161
        %p163 = pneg %p38
        %p164 = pneg %p35
        %s165 = smul.u32 32, %s17
        %p166 = scmp.lt.s32.totalorder %s165, 63
        %s167 = scalar_select %p166, %s165, 63
        %s168 = smul.addr %s167, 8
        %s169 = scalar_lea.vmem %s1, %s168
        %p170 = pneg %p64
        %p171 = pneg %p61
        %p172 = pneg %p85
        %p173 = pneg %p82
        %p174 = pneg %p111
        %p175 = pneg %p108
        %s176 = sand.u32 %s98, 1
        %s177 = scalar_lea.sflag [#allocation3], %s176
        %s178 = sand.u32 %s98, 1
        %s179 = smul.addr %s178, 256
        %s180 = scalar_lea.vmem [#allocation2], %s179
        %s181 = smul.u32 32, %s17
        %p182 = scmp.lt.s32.totalorder %s181, 63
        %s183 = scalar_select %p182, %s181, 63
        %s184 = smul.addr %s183, 8
        %s185 = scalar_lea.vmem %s0, %s184
        %s186 = smul.u32 32, %s17
        %s187 = smul.u32 32, %s17
        %p188 = scmp.lt.s32.totalorder %s187, 63
        %s189 = scalar_select %p188, %s187, 63
        %s190 = smul.addr %s189, 8
        %s191 = scalar_lea.vmem %s1, %s190
        %s192 = smul.u32 32, %s17
        %s193 = smul.u32 32, %s17
        %v194 = vld [vmem:[%s191] sm:$0xff]
        %v195 = vld [vmem:[%s191 + $0x8] sm:$0xff]
        %v196 = vld [vmem:[%s191 + $0x10] sm:$0xff]
        %v197 = vld [vmem:[%s191 + $0x18] sm:$0xff]
        %v198 = vld [vmem:[%s191 + $0x20] sm:$0xff]
        %v199 = vld [vmem:[%s191 + $0x28] sm:$0xff]
        %v200 = vld [vmem:[%s191 + $0x30] sm:$0xff]
        %v201 = vld [vmem:[%s191 + $0x38] sm:$0xff]
        %v202 = vld [vmem:[%s191 + $0x40] sm:$0xff]
        %v203 = vld [vmem:[%s191 + $0x48] sm:$0xff]
        %v204 = vld [vmem:[%s191 + $0x50] sm:$0xff]
        %v205 = vld [vmem:[%s191 + $0x58] sm:$0xff]
        %v206 = vld [vmem:[%s191 + $0x60] sm:$0xff]
        %v207 = vld [vmem:[%s191 + $0x68] sm:$0xff]
        %v208 = vld [vmem:[%s191 + $0x70] sm:$0xff]
        %v209 = vld [vmem:[%s191 + $0x78] sm:$0xff]
        %v210 = vld [vmem:[%s191 + $0x80] sm:$0xff]
        %v211 = vld [vmem:[%s191 + $0x88] sm:$0xff]
        %v212 = vld [vmem:[%s191 + $0x90] sm:$0xff]
        %v213 = vld [vmem:[%s191 + $0x98] sm:$0xff]
        %v214 = vld [vmem:[%s191 + $0xa0] sm:$0xff]
        %v215 = vld [vmem:[%s191 + $0xa8] sm:$0xff]
        %v216 = vld [vmem:[%s191 + $0xb0] sm:$0xff]
        %v217 = vld [vmem:[%s191 + $0xb8] sm:$0xff]
        %v218 = vld [vmem:[%s191 + $0xc0] sm:$0xff]
        %v219 = vld [vmem:[%s191 + $0xc8] sm:$0xff]
        %v220 = vld [vmem:[%s191 + $0xd0] sm:$0xff]
        %v221 = vld [vmem:[%s191 + $0xd8] sm:$0xff]
        %v222 = vld [vmem:[%s191 + $0xe0] sm:$0xff]
        %v223 = vld [vmem:[%s191 + $0xe8] sm:$0xff]
        %v224 = vld [vmem:[%s191 + $0xf0] sm:$0xff]
        %v225 = vld [vmem:[%s191 + $0xf8] sm:$0xff]
        %v226 = vld [vmem:[%s2] sm:$0x1]
        %v228 = vperm.slane %v226, 0
        %v230 = vadd.f32 %v194, %v228
        %v231 = vadd.f32 %v195, %v228
        %v232 = vadd.f32 %v196, %v228
        %v233 = vadd.f32 %v197, %v228
        %v234 = vadd.f32 %v198, %v228
        %v235 = vadd.f32 %v199, %v228
        %v236 = vadd.f32 %v200, %v228
        %v237 = vadd.f32 %v201, %v228
        %v238 = vadd.f32 %v202, %v228
        %v239 = vadd.f32 %v203, %v228
        %v240 = vadd.f32 %v204, %v228
        %v241 = vadd.f32 %v205, %v228
        %v242 = vadd.f32 %v206, %v228
        %v243 = vadd.f32 %v207, %v228
        %v244 = vadd.f32 %v208, %v228
        %v245 = vadd.f32 %v209, %v228
        %v246 = vadd.f32 %v210, %v228
        %v247 = vadd.f32 %v211, %v228
        %v248 = vadd.f32 %v212, %v228
        %v249 = vadd.f32 %v213, %v228
        %v250 = vadd.f32 %v214, %v228
        %v251 = vadd.f32 %v215, %v228
        %v252 = vadd.f32 %v216, %v228
        %v253 = vadd.f32 %v217, %v228
        %v254 = vadd.f32 %v218, %v228
        %v255 = vadd.f32 %v219, %v228
        %v256 = vadd.f32 %v220, %v228
        %v257 = vadd.f32 %v221, %v228
        %v258 = vadd.f32 %v222, %v228
        %v259 = vadd.f32 %v223, %v228
        %v260 = vadd.f32 %v224, %v228
        %v261 = vadd.f32 %v225, %v228
        %v262 = vmax.f32 %v230, 0.0
        %v263 = vmax.f32 %v231, 0.0
        %v264 = vmax.f32 %v232, 0.0
        %v265 = vmax.f32 %v233, 0.0
        %v266 = vmax.f32 %v234, 0.0
        %v267 = vmax.f32 %v235, 0.0
        %v268 = vmax.f32 %v236, 0.0
        %v269 = vmax.f32 %v237, 0.0
        %v270 = vmax.f32 %v238, 0.0
        %v271 = vmax.f32 %v239, 0.0
        %v272 = vmax.f32 %v240, 0.0
        %v273 = vmax.f32 %v241, 0.0
        %v274 = vmax.f32 %v242, 0.0
        %v275 = vmax.f32 %v243, 0.0
        %v276 = vmax.f32 %v244, 0.0
        %v277 = vmax.f32 %v245, 0.0
        %v278 = vmax.f32 %v246, 0.0
        %v279 = vmax.f32 %v247, 0.0
        %v280 = vmax.f32 %v248, 0.0
        %v281 = vmax.f32 %v249, 0.0
        %v282 = vmax.f32 %v250, 0.0
        %v283 = vmax.f32 %v251, 0.0
        %v284 = vmax.f32 %v252, 0.0
        %v285 = vmax.f32 %v253, 0.0
        %v286 = vmax.f32 %v254, 0.0
        %v287 = vmax.f32 %v255, 0.0
        %v288 = vmax.f32 %v256, 0.0
        %v289 = vmax.f32 %v257, 0.0
        %v290 = vmax.f32 %v258, 0.0
        %v291 = vmax.f32 %v259, 0.0
        %v292 = vmax.f32 %v260, 0.0
        %v293 = vmax.f32 %v261, 0.0
        %v294 = vld [vmem:[%s185] sm:$0xff]
        %v295 = vld [vmem:[%s185 + $0x8] sm:$0xff]
        %v296 = vld [vmem:[%s185 + $0x10] sm:$0xff]
        %v297 = vld [vmem:[%s185 + $0x18] sm:$0xff]
        %v298 = vld [vmem:[%s185 + $0x20] sm:$0xff]
        %v299 = vld [vmem:[%s185 + $0x28] sm:$0xff]
        %v300 = vld [vmem:[%s185 + $0x30] sm:$0xff]
        %v301 = vld [vmem:[%s185 + $0x38] sm:$0xff]
        %v302 = vld [vmem:[%s185 + $0x40] sm:$0xff]
        %v303 = vld [vmem:[%s185 + $0x48] sm:$0xff]
        %v304 = vld [vmem:[%s185 + $0x50] sm:$0xff]
        %v305 = vld [vmem:[%s185 + $0x58] sm:$0xff]
        %v306 = vld [vmem:[%s185 + $0x60] sm:$0xff]
        %v307 = vld [vmem:[%s185 + $0x68] sm:$0xff]
        %v308 = vld [vmem:[%s185 + $0x70] sm:$0xff]
        %v309 = vld [vmem:[%s185 + $0x78] sm:$0xff]
        %v310 = vld [vmem:[%s185 + $0x80] sm:$0xff]
        %v311 = vld [vmem:[%s185 + $0x88] sm:$0xff]
        %v312 = vld [vmem:[%s185 + $0x90] sm:$0xff]
        %v313 = vld [vmem:[%s185 + $0x98] sm:$0xff]
        %v314 = vld [vmem:[%s185 + $0xa0] sm:$0xff]
        %v315 = vld [vmem:[%s185 + $0xa8] sm:$0xff]
        %v316 = vld [vmem:[%s185 + $0xb0] sm:$0xff]
        %v317 = vld [vmem:[%s185 + $0xb8] sm:$0xff]
        %v318 = vld [vmem:[%s185 + $0xc0] sm:$0xff]
        %v319 = vld [vmem:[%s185 + $0xc8] sm:$0xff]
        %v320 = vld [vmem:[%s185 + $0xd0] sm:$0xff]
        %v321 = vld [vmem:[%s185 + $0xd8] sm:$0xff]
        %v322 = vld [vmem:[%s185 + $0xe0] sm:$0xff]
        %v323 = vld [vmem:[%s185 + $0xe8] sm:$0xff]
        %v324 = vld [vmem:[%s185 + $0xf0] sm:$0xff]
        %v325 = vld [vmem:[%s185 + $0xf8] sm:$0xff]
        %358 = vrot.lane.b32.xlu0 %v262, 64
        %v359 = vpop.permute.xlu0 %358
        %360 = vrot.lane.b32.xlu0 %v263, 64
        %v361 = vpop.permute.xlu0 %360
        %362 = vrot.lane.b32.xlu0 %v264, 64
        %v363 = vpop.permute.xlu0 %362
        %364 = vrot.lane.b32.xlu0 %v265, 64
        %v365 = vpop.permute.xlu0 %364
        %366 = vrot.lane.b32.xlu0 %v266, 64
        %v367 = vpop.permute.xlu0 %366
        %368 = vrot.lane.b32.xlu0 %v267, 64
        %v369 = vpop.permute.xlu0 %368
        %370 = vrot.lane.b32.xlu0 %v268, 64
        %v371 = vpop.permute.xlu0 %370
        %372 = vrot.lane.b32.xlu0 %v269, 64
        %v373 = vpop.permute.xlu0 %372
        %374 = vrot.lane.b32.xlu0 %v270, 64
        %v375 = vpop.permute.xlu0 %374
        %376 = vrot.lane.b32.xlu0 %v271, 64
        %v377 = vpop.permute.xlu0 %376
        %378 = vrot.lane.b32.xlu0 %v272, 64
        %v379 = vpop.permute.xlu0 %378
        %380 = vrot.lane.b32.xlu0 %v273, 64
        %v381 = vpop.permute.xlu0 %380
        %382 = vrot.lane.b32.xlu0 %v274, 64
        %v383 = vpop.permute.xlu0 %382
        %384 = vrot.lane.b32.xlu0 %v275, 64
        %v385 = vpop.permute.xlu0 %384
        %386 = vrot.lane.b32.xlu0 %v276, 64
        %v387 = vpop.permute.xlu0 %386
        %388 = vrot.lane.b32.xlu0 %v277, 64
        %v389 = vpop.permute.xlu0 %388
        %390 = vrot.lane.b32.xlu0 %v278, 64
        %v391 = vpop.permute.xlu0 %390
        %392 = vrot.lane.b32.xlu0 %v279, 64
        %v393 = vpop.permute.xlu0 %392
        %394 = vrot.lane.b32.xlu0 %v280, 64
        %v395 = vpop.permute.xlu0 %394
        %396 = vrot.lane.b32.xlu0 %v281, 64
        %v397 = vpop.permute.xlu0 %396
        %398 = vrot.lane.b32.xlu0 %v282, 64
        %v399 = vpop.permute.xlu0 %398
        %400 = vrot.lane.b32.xlu0 %v283, 64
        %v401 = vpop.permute.xlu0 %400
        %402 = vrot.lane.b32.xlu0 %v284, 64
        %v403 = vpop.permute.xlu0 %402
        %404 = vrot.lane.b32.xlu0 %v285, 64
        %v405 = vpop.permute.xlu0 %404
        %406 = vrot.lane.b32.xlu0 %v286, 64
        %v407 = vpop.permute.xlu0 %406
        %408 = vrot.lane.b32.xlu0 %v287, 64
        %v409 = vpop.permute.xlu0 %408
        %410 = vrot.lane.b32.xlu0 %v288, 64
        %v411 = vpop.permute.xlu0 %410
        %412 = vrot.lane.b32.xlu0 %v289, 64
        %v413 = vpop.permute.xlu0 %412
        %414 = vrot.lane.b32.xlu0 %v290, 64
        %v415 = vpop.permute.xlu0 %414
        %416 = vrot.lane.b32.xlu0 %v291, 64
        %v417 = vpop.permute.xlu0 %416
        %418 = vrot.lane.b32.xlu0 %v292, 64
        %v419 = vpop.permute.xlu0 %418
        %420 = vrot.lane.b32.xlu0 %v293, 64
        %v421 = vpop.permute.xlu0 %420
        %vm454 = vcmask 523264
        %v455 = vsel %vm454, %v294, %v359
        %v456 = vsel %vm454, %v295, %v361
        %v457 = vsel %vm454, %v296, %v363
        %v458 = vsel %vm454, %v297, %v365
        %v459 = vsel %vm454, %v298, %v367
        %v460 = vsel %vm454, %v299, %v369
        %v461 = vsel %vm454, %v300, %v371
        %v462 = vsel %vm454, %v301, %v373
        %v463 = vsel %vm454, %v302, %v375
        %v464 = vsel %vm454, %v303, %v377
        %v465 = vsel %vm454, %v304, %v379
        %v466 = vsel %vm454, %v305, %v381
        %v467 = vsel %vm454, %v306, %v383
        %v468 = vsel %vm454, %v307, %v385
        %v469 = vsel %vm454, %v308, %v387
        %v470 = vsel %vm454, %v309, %v389
        %v471 = vsel %vm454, %v310, %v391
        %v472 = vsel %vm454, %v311, %v393
        %v473 = vsel %vm454, %v312, %v395
        %v474 = vsel %vm454, %v313, %v397
        %v475 = vsel %vm454, %v314, %v399
        %v476 = vsel %vm454, %v315, %v401
        %v477 = vsel %vm454, %v316, %v403
        %v478 = vsel %vm454, %v317, %v405
        %v479 = vsel %vm454, %v318, %v407
        %v480 = vsel %vm454, %v319, %v409
        %v481 = vsel %vm454, %v320, %v411
        %v482 = vsel %vm454, %v321, %v413
        %v483 = vsel %vm454, %v322, %v415
        %v484 = vsel %vm454, %v323, %v417
        %v485 = vsel %vm454, %v324, %v419
        %v486 = vsel %vm454, %v325, %v421
        %487 = vst [vmem:[%s180] sm:$0xff] %v455
        %488 = vst [vmem:[%s180 + $0x8] sm:$0xff] %v456
        %489 = vst [vmem:[%s180 + $0x10] sm:$0xff] %v457
        %490 = vst [vmem:[%s180 + $0x18] sm:$0xff] %v458
        %491 = vst [vmem:[%s180 + $0x20] sm:$0xff] %v459
        %492 = vst [vmem:[%s180 + $0x28] sm:$0xff] %v460
        %493 = vst [vmem:[%s180 + $0x30] sm:$0xff] %v461
        %494 = vst [vmem:[%s180 + $0x38] sm:$0xff] %v462
        %495 = vst [vmem:[%s180 + $0x40] sm:$0xff] %v463
        %496 = vst [vmem:[%s180 + $0x48] sm:$0xff] %v464
        %497 = vst [vmem:[%s180 + $0x50] sm:$0xff] %v465
        %498 = vst [vmem:[%s180 + $0x58] sm:$0xff] %v466
        %499 = vst [vmem:[%s180 + $0x60] sm:$0xff] %v467
        %500 = vst [vmem:[%s180 + $0x68] sm:$0xff] %v468
        %501 = vst [vmem:[%s180 + $0x70] sm:$0xff] %v469
        %502 = vst [vmem:[%s180 + $0x78] sm:$0xff] %v470
        %503 = vst [vmem:[%s180 + $0x80] sm:$0xff] %v471
        %504 = vst [vmem:[%s180 + $0x88] sm:$0xff] %v472
        %505 = vst [vmem:[%s180 + $0x90] sm:$0xff] %v473
        %506 = vst [vmem:[%s180 + $0x98] sm:$0xff] %v474
        %507 = vst [vmem:[%s180 + $0xa0] sm:$0xff] %v475
        %508 = vst [vmem:[%s180 + $0xa8] sm:$0xff] %v476
        %509 = vst [vmem:[%s180 + $0xb0] sm:$0xff] %v477
        %510 = vst [vmem:[%s180 + $0xb8] sm:$0xff] %v478
        %511 = vst [vmem:[%s180 + $0xc0] sm:$0xff] %v479
        %512 = vst [vmem:[%s180 + $0xc8] sm:$0xff] %v480
        %513 = vst [vmem:[%s180 + $0xd0] sm:$0xff] %v481
        %514 = vst [vmem:[%s180 + $0xd8] sm:$0xff] %v482
        %515 = vst [vmem:[%s180 + $0xe0] sm:$0xff] %v483
        %516 = vst [vmem:[%s180 + $0xe8] sm:$0xff] %v484
        %517 = vst [vmem:[%s180 + $0xf0] sm:$0xff] %v485
        %518 = vst [vmem:[%s180 + $0xf8] sm:$0xff] %v486
        %s519 = sand.u32 %s98, 1
        %s520 = scalar_lea.sflag [#allocation3], %s519
        %s521 = sand.u32 %s98, 1
        %s522 = smul.addr %s521, 256
        %s523 = scalar_lea.vmem [#allocation2], %s522
        // Predicated region
        $region33: #{tpu_custom_call.1} parent=31 // pred_check
          %p524 = pneg %p108
        $region34: #{tpu_custom_call.1} parent=31 // pred_check_branch
          %526 = sbr.rel (%p524) target = $region36
        $region35: #{tpu_custom_call.1} parent=31 // pred_region
          %s527 = smul.u32 32, %s17
          %529 = vsyncadd %s520, 0
          %s530 = smul.addr %s527, 8
          %s531 = scalar_lea.hbm %s3, %s530
          %s532 = sshll.u32 %s523, 4
          %s533 = int_to_ptr.vmem [resolvable:$true] %s532
          %s534 = sshll.u32 %s531, 4
          %s535 = int_to_ptr.hbm [resolvable:$true] %s534
          %540 = dma.vmem_to_hbm [thread:$0]  %s533, 4096, %s535, %s520, 128, 128, 8
        $region36: #{tpu_custom_call.1} parent=31 // pred_fallthru
          _
      $region32: #{tpu_custom_call.1} parent=5 // pred_fallthru
        _
      %p541 = scmp.le.s32.totalorder 2, %s12
      // Predicated region
      $region37: #{tpu_custom_call.1} parent=5 // pred_check
        %p542 = pneg %p541
      $region38: #{tpu_custom_call.1} parent=5 // pred_check_branch
        %544 = sbr.rel (%p542) target = $region40
      $region39: #{tpu_custom_call.1} parent=5 // pred_region
        %s545 = ssub.s32 %s12, 2
        // Predicated region
        $region41: #{tpu_custom_call.1} parent=39 // pred_check
          %p546 = pneg %p114
        $region42: #{tpu_custom_call.1} parent=39 // pred_check_branch
          %548 = sbr.rel (%p546) target = $region44
        $region43: #{tpu_custom_call.1} parent=39 // pred_region
          %s549 = sand.u32 %s99, 1
          %s550 = scalar_lea.sflag [#allocation3], %s549
          %s551 = sand.u32 %s99, 1
          %s552 = smul.addr %s551, 256
          %s553 = scalar_lea.vmem [#allocation2], %s552
          %555 = dma.done %s550, 4096
        $region44: #{tpu_custom_call.1} parent=39 // pred_fallthru
          _
      $region40: #{tpu_custom_call.1} parent=5 // pred_fallthru
        _
    $region6: #{tpu_custom_call.1} parent=1 // loop_footer
      %s16 = sadd.s32 1, %s12
    $region7: #{tpu_custom_call.1} parent=1 // loop_footer_branch
      %11 = sbr.rel target = $region3
    $region8: #{tpu_custom_call.1} parent=1 // loop_exit
      _
    %556 = vsyncpa [#allocation3], 1
    %s557 = scalar_lea.sflag [#allocation3], 1
    %558 = vsyncpa %s557, 1

</llo_original>
